<compile_context>
chip_gen: v7x
topology: tpu7x:2x2x1
jax: 0.10.0
libtpu: 0.0.40
codegen_flags: <defaults>
</compile_context>

<pallas_src>
import math

import jax
import jax.numpy as jnp
from jax import lax
from jax.experimental import pallas as pl
from jax.experimental.pallas import tpu as pltpu


def _vmem_budgets():
    """Generation-aware (scoped-VMEM limit, TB-picking budget) in bytes."""
    try:
        phys = pltpu.get_tpu_info().vmem_capacity_bytes
    except Exception:
        phys = 64 * 1024 * 1024  # be conservative (v7x per-core size)
    if phys >= 96 * 1024 * 1024:
        # v5e / v6e: 128 MiB physical VMEM -> use most of it.
        return 100 * 1024 * 1024, 64 * 1024 * 1024
    # v7x: 64 MiB per TensorCore -> leave headroom for Mosaic internal scratch.
    return 48 * 1024 * 1024, 26 * 1024 * 1024


def _interp_matrix(out_size: int, in_size: int, dtype=jnp.float32):
    """Row-interpolation matrix for 1-D linear resize with align_corners=True."""
    if in_size == 1:
        return jnp.ones((out_size, 1), dtype=dtype)
    src = jnp.arange(out_size, dtype=jnp.float32) * (in_size - 1) / (out_size - 1)
    low = jnp.clip(jnp.floor(src).astype(jnp.int32), 0, in_size - 2)
    frac = src - low.astype(jnp.float32)
    idx = jnp.arange(in_size)
    w_low = (idx[None, :] == low[:, None]).astype(jnp.float32) * (1.0 - frac)[:, None]
    w_high = (idx[None, :] == (low + 1)[:, None]).astype(jnp.float32) * frac[:, None]
    return (w_low + w_high).astype(dtype)


def _sublane_align(H: int, itemsize: int) -> int:
    """TB multiple needed so TB*H is a whole number of packed sublanes."""
    sub = 8 * max(1, 4 // itemsize)  # 8 (f32), 16 (bf16), 32 (int8)
    return sub // math.gcd(H, sub)


def _choose_tb(B: int, H: int, W: int, itemsize: int, scratch_itemsize: int,
               vmem_budget: int) -> int:
    """Pick how many (n,c) slices to process per grid step."""
    Ho, Wo = 2 * H, 2 * W
    w_item = 4 if itemsize >= 4 else itemsize
    # Constant interpolation matrices (assume double-buffered by the pipeline).
    const_bytes = 2 * w_item * (Ho * H + W * Wo)
    # Per-slice VMEM: double-buffered in/out blocks + scratch.
    per_slice = (2 * H * W * itemsize + 2 * Ho * Wo * itemsize
                 + Ho * W * scratch_itemsize)
    avail = max(per_slice, vmem_budget - const_bytes)
    tb = max(1, avail // per_slice)

    # Keep >= ~4 grid steps (when B allows): the pipeline always has a block to
    # prefetch / write back, and v7x megacore gets >= 2 steps per TensorCore.
    tb = min(tb, max(1, pl.cdiv(B, min(B, 4))))
    tb = min(tb, B)

    align = _sublane_align(H, itemsize)
    if tb < B and tb >= align:
        # Round DOWN to the sublane alignment (never exceed the VMEM budget).
        tb = (tb // align) * align
    # else: keep the (possibly sublane-misaligned) budget-driven TB; the
    # Ho-tiling TODO would remove this trade-off at very large H, W.

    if tb < B:
        # Even out the number of grid blocks without exceeding the budgeted TB.
        nblocks = pl.cdiv(B, tb)
        tb_even = pl.cdiv(B, nblocks)
        if tb >= align:
            tb_even = pl.cdiv(tb_even, align) * align
        tb = max(1, min(tb, tb_even))
    return int(tb)


def _make_kernel(TB: int, H: int, W: int, scratch_dtype):
    Ho, Wo = 2 * H, 2 * W

    def kernel(ah_ref, awt_ref, x_ref, o_ref, u_ref):
        # ah_ref : (Ho, H)      constant H-interp matrix
        # awt_ref: (W, Wo)      constant W-interp matrix (transposed)
        # x_ref  : (TB*H, W)    TB stacked input slices
        # o_ref  : (TB*Ho, Wo)  TB stacked output slices
        # u_ref  : (TB*Ho, W)   scratch holding the H-interpolated slices
        ah = ah_ref[...]

        if TB <= 8:
            # Tiny fixed trip count: static unroll with static slice offsets.
            for i in range(TB):
                xs = x_ref[pl.ds(i * H, H), :]                      # (H, W)
                u_ref[pl.ds(i * Ho, Ho), :] = jnp.dot(
                    ah, xs, preferred_element_type=jnp.float32
                ).astype(scratch_dtype)                             # (Ho, W)
        else:
            # Unrolled fori_loop: LLO visibility + bounded vreg live ranges.
            def body(i, carry):
                start_x = pl.multiple_of(i * H, H)
                start_u = pl.multiple_of(i * Ho, Ho)
                xs = x_ref[pl.ds(start_x, H), :]
                u_ref[pl.ds(start_u, Ho), :] = jnp.dot(
                    ah, xs, preferred_element_type=jnp.float32
                ).astype(scratch_dtype)
                return carry

            lax.fori_loop(0, TB, body, 0, unroll=8)

        # W-interp with the whole sub-batch folded into the matmul M dimension:
        # (TB*Ho, W) @ (W, Wo) -> (TB*Ho, Wo), stored as one big 2D slab.
        o_ref[...] = jnp.dot(
            u_ref[...], awt_ref[...],
            preferred_element_type=jnp.float32).astype(o_ref.dtype)

    return kernel


def interpolate_bilinear_x2(x):
    """x: (N, C, H, W) -> (N, C, 2H, 2W), matching
    torch.nn.functional.interpolate(x, scale_factor=2, mode='bilinear',
    align_corners=True)."""
    N, C, H, W = x.shape
    Ho, Wo = 2 * H, 2 * W
    B = N * C

    # f32 inputs: fully f32 pipeline (exact parity with the f32 reference).
    # bf16 inputs: bf16 weights + bf16 scratch so the dominant folded W-matmul
    # is a pure bf16 x bf16 MXU op (f32 accumulate); differs from PyTorch only
    # at bf16 precision.
    if x.dtype == jnp.bfloat16:
        wdtype = jnp.bfloat16
        sdtype = jnp.bfloat16
    else:
        wdtype = jnp.float32
        sdtype = jnp.float32

    ah = _interp_matrix(Ho, H).astype(wdtype)       # (Ho, H)
    awt = _interp_matrix(Wo, W).T.astype(wdtype)    # (W, Wo)

    vmem_limit, vmem_budget = _vmem_budgets()
    TB = _choose_tb(B, H, W, x.dtype.itemsize, jnp.dtype(sdtype).itemsize,
                    vmem_budget)
    grid_b = pl.cdiv(B, TB)

    # Free row-major reshapes: (N,C,H,W) -> (B*H, W); (B*Ho, Wo) -> (N,C,Ho,Wo).
    xf = x.reshape(B * H, W)

    kernel = _make_kernel(TB, H, W, sdtype)

    out = pl.pallas_call(
        kernel,
        out_shape=jax.ShapeDtypeStruct((B * Ho, Wo), x.dtype),
        grid_spec=pltpu.PrefetchScalarGridSpec(
            num_scalar_prefetch=0,
            grid=(grid_b,),
            in_specs=[
                # Constant index_map -> fetched once, never re-DMA'd.
                pl.BlockSpec((Ho, H), lambda b: (0, 0)),      # A_h
                pl.BlockSpec((W, Wo), lambda b: (0, 0)),      # A_w^T
                pl.BlockSpec((TB * H, W), lambda b: (b, 0)),  # TB input slices
            ],
            out_specs=pl.BlockSpec((TB * Ho, Wo), lambda b: (b, 0)),
            scratch_shapes=[pltpu.VMEM((TB * Ho, W), sdtype)],
        ),
        compiler_params=pltpu.CompilerParams(
            dimension_semantics=("parallel",),   # shard batch steps on v7x TCs
            vmem_limit_bytes=vmem_limit,
        ),
        cost_estimate=pl.CostEstimate(
            flops=2 * B * Ho * W * (H + Wo),
            transcendentals=0,
            bytes_accessed=(x.size + B * Ho * Wo) * x.dtype.itemsize
                           + (Ho * H + W * Wo) * jnp.dtype(wdtype).itemsize,
        ),
    )(ah, awt, xf)

    return out.reshape(N, C, Ho, Wo)


if __name__ == "__main__":
    key = jax.random.PRNGKey(0)
    N, C, H, W = 2, 4, 16, 16
    x = jax.random.normal(key, (N, C, H, W), dtype=jnp.float32)

    y = interpolate_bilinear_x2(x)
    y = jax.block_until_ready(y)

    # Pure-JAX reference of the same separable bilinear map (align_corners=True).
    ah = _interp_matrix(2 * H, H)
    aw = _interp_matrix(2 * W, W)
    ref = jnp.einsum("oh,nchw,pw->ncop", ah, x, aw)
    assert y.shape == (N, C, 2 * H, 2 * W)
    assert jnp.allclose(y, ref, atol=1e-5, rtol=1e-5)

    print("KERNEL_OK")
</pallas_src>

<mosaic_0001>
module attributes {stable_mosaic.version = 11 : i64} {
  func.func @kernel(%arg0: i32, %arg1: memref<32x16xf32, #tpu.memory_space<vmem>>, %arg2: memref<16x32xf32, #tpu.memory_space<vmem>>, %arg3: memref<32x16xf32, #tpu.memory_space<vmem>>, %arg4: memref<64x32xf32, #tpu.memory_space<vmem>>, %arg5: memref<64x16xf32, #tpu.memory_space<vmem>>) attributes {dimension_semantics = [#tpu.dimension_semantics<parallel>], iteration_bounds = array<i64: 4>, scalar_prefetch = 0 : i64, scratch_operands = 1 : i64, tpu.core_type = #tpu.core_type<tc>, window_params = [{pipeline_mode = #tpu.pipeline_mode<synchronous>, transform_indices = @transform_0, window_bounds = array<i64: 32, 16>}, {pipeline_mode = #tpu.pipeline_mode<synchronous>, transform_indices = @transform_1, window_bounds = array<i64: 16, 32>}, {transform_indices = @transform_2, window_bounds = array<i64: 32, 16>}, {transform_indices = @transform_3, window_bounds = array<i64: 64, 32>}]} {
    %c0 = arith.constant 0 : index
    %c0_0 = arith.constant 0 : index
    %0 = vector.load %arg1[%c0, %c0_0] : memref<32x16xf32, #tpu.memory_space<vmem>>, vector<32x16xf32>
    %c0_1 = arith.constant 0 : index
    %c0_2 = arith.constant 0 : index
    %1 = vector.load %arg3[%c0_1, %c0_2] : memref<32x16xf32, #tpu.memory_space<vmem>>, vector<16x16xf32>
    %cst = arith.constant dense<0.000000e+00> : vector<32x16xf32>
    %2 = tpu.matmul %0, %1, %cst {dimension_numbers = #tpu.dot_dimension_numbers<[1], [0], [0], [1], [0, 0, 1, 1], [], []>} : vector<32x16xf32>, vector<16x16xf32>, vector<32x16xf32> -> vector<32x16xf32>
    %c0_3 = arith.constant 0 : index
    %c0_4 = arith.constant 0 : index
    %3 = vector.load %arg5[%c0_3, %c0_4] : memref<64x16xf32, #tpu.memory_space<vmem>>, vector<32x16xf32>
    tpu.vector_store %arg5[%c0_3, %c0_4], %2 {strides = array<i32>} : memref<64x16xf32, #tpu.memory_space<vmem>>, vector<32x16xf32>,
    %c16 = arith.constant 16 : index
    %c0_5 = arith.constant 0 : index
    %4 = vector.load %arg3[%c16, %c0_5] : memref<32x16xf32, #tpu.memory_space<vmem>>, vector<16x16xf32>
    %cst_6 = arith.constant dense<0.000000e+00> : vector<32x16xf32>
    %5 = tpu.matmul %0, %4, %cst_6 {dimension_numbers = #tpu.dot_dimension_numbers<[1], [0], [0], [1], [0, 0, 1, 1], [], []>} : vector<32x16xf32>, vector<16x16xf32>, vector<32x16xf32> -> vector<32x16xf32>
    %c32 = arith.constant 32 : index
    %c0_7 = arith.constant 0 : index
    %6 = vector.load %arg5[%c32, %c0_7] : memref<64x16xf32, #tpu.memory_space<vmem>>, vector<32x16xf32>
    tpu.vector_store %arg5[%c32, %c0_7], %5 {strides = array<i32>} : memref<64x16xf32, #tpu.memory_space<vmem>>, vector<32x16xf32>,
    %c0_8 = arith.constant 0 : index
    %c0_9 = arith.constant 0 : index
    %7 = vector.load %arg5[%c0_8, %c0_9] : memref<64x16xf32, #tpu.memory_space<vmem>>, vector<64x16xf32>
    %c0_10 = arith.constant 0 : index
    %c0_11 = arith.constant 0 : index
    %8 = vector.load %arg2[%c0_10, %c0_11] : memref<16x32xf32, #tpu.memory_space<vmem>>, vector<16x32xf32>
    %cst_12 = arith.constant dense<0.000000e+00> : vector<64x32xf32>
    %9 = tpu.matmul %7, %8, %cst_12 {dimension_numbers = #tpu.dot_dimension_numbers<[1], [0], [0], [1], [0, 0, 1, 1], [], []>} : vector<64x16xf32>, vector<16x32xf32>, vector<64x32xf32> -> vector<64x32xf32>
    %c0_13 = arith.constant 0 : index
    %c0_14 = arith.constant 0 : index
    %10 = vector.load %arg4[%c0_13, %c0_14] : memref<64x32xf32, #tpu.memory_space<vmem>>, vector<64x32xf32>
    tpu.vector_store %arg4[%c0_13, %c0_14], %9 {strides = array<i32>} : memref<64x32xf32, #tpu.memory_space<vmem>>, vector<64x32xf32>,
    return
  }
  func.func @transform_0(%arg0: i32) -> (i32, i32) {
    %c0_i32 = arith.constant 0 : i32
    %c0_i32_0 = arith.constant 0 : i32
    %c0_i32_1 = arith.constant 0 : i32
    return %c0_i32, %c0_i32_0 : i32, i32
  }
  func.func @transform_1(%arg0: i32) -> (i32, i32) {
    %c0_i32 = arith.constant 0 : i32
    %c0_i32_0 = arith.constant 0 : i32
    %c0_i32_1 = arith.constant 0 : i32
    return %c0_i32, %c0_i32_0 : i32, i32
  }
  func.func @transform_2(%arg0: i32) -> (i32, i32) {
    %c0_i32 = arith.constant 0 : i32
    %c0_i32_0 = arith.constant 0 : i32
    return %arg0, %c0_i32 : i32, i32
  }
  func.func @transform_3(%arg0: i32) -> (i32, i32) {
    %c0_i32 = arith.constant 0 : i32
    %c0_i32_0 = arith.constant 0 : i32
    return %arg0, %c0_i32 : i32, i32
  }
}

</mosaic_0001>

<llo_original>
// kernel: tpu_custom_call.1
$region0: #{tpu_custom_call.1}
  #allocation0 [shape = 'u32[]', space=smem, size = 0x4, offset = 0x4, fixed_abs, tag = 'smem constant byte address 0x4 - core index']
  #allocation1 [shape = 'u32[144,128]{1,0:T(1,128)}', space=vmem, size = 0x12000, scoped, tag = 'internal scratch']
  #allocation2 [shape = 'f32[64,16]{1,0:T(8,128)}', space=vmem, size = 0x8000, scoped, tag = 'scratch operand']
  %s0 = inlined_call_operand.vmem [shape: f32[32,16], index: 0, kind: input, shape index: {}]
  %s1 = inlined_call_operand.vmem [shape: f32[16,32], index: 1, kind: input, shape index: {}]
  %s2 = inlined_call_operand.vmem [shape: f32[128,16], index: 2, kind: input, shape index: {}]
  %s3 = inlined_call_operand.vmem [shape: f32[256,32], index: 3, kind: output, shape index: {}]
  %s4 = sld [smem:[#allocation0]]
  $region45: #{tpu_custom_call.1} parent=0
    _
  %s6 = ssub.s32 1, %s4
  %s7 = scalar_select 0, %s6, %s4
  loop: start=0, step=1, limit=6
  $region2: #{tpu_custom_call.1} parent=0 // loop_pre_header
    _
  $region3: #{tpu_custom_call.1} parent=0 // loop_header
    %s9 = sphi 0, %s13
    %p10 = scmp.ge.s32.totalorder %s9, 6
    %s17 = sphi 0, %s17
    %s19 = sphi 0, %s17
    %s20 = sphi 0, %s19
    %s34 = sphi 0, %s20
    %s38 = sphi 0, %s38
    %s40 = sphi 0, %s38
    %s41 = sphi 0, %s40
    %s55 = sphi 0, %s41
    %s61 = sphi 0, %s63
    %s64 = sphi 0, %s61
    %s65 = sphi 0, %s64
    %s81 = sphi 0, %s65
    %s87 = sphi 0, %s89
    %s90 = sphi 0, %s87
    %s91 = sphi 0, %s90
    %s107 = sphi 0, %s91
  $region4: #{tpu_custom_call.1} parent=0 // loop_header_branch
    %12 = sbr.rel (%p10) target = $region8
  $region5: #{tpu_custom_call.1} parent=0 // loop_body
    %s14 = ssub.s32 %s9, 1
    %s15 = ssub.s32 %s9, 2
    %s16 = sadd.s32 %s9, 1
    %s18 = sadd.s32 %s17, 1
    %p21 = scmp.eq.s32.totalorder %s9, 3
    %p22 = scmp.ne.s32.totalorder %s17, %s19
    %p23 = scmp.eq.s32.totalorder %s9, 0
    %p24 = por %p22, %p23
    %p25 = scmp.ne.s32.totalorder %s17, %s19
    %p26 = scmp.eq.s32.totalorder %s14, 3
    %p27 = por %p25, %p26
    %p28 = scmp.ne.s32.totalorder %s19, %s20
    %p29 = scmp.eq.s32.totalorder %s14, 0
    %p30 = por %p28, %p29
    %p31 = scmp.ne.s32.totalorder %s19, %s20
    %p32 = scmp.eq.s32.totalorder %s15, 3
    %p33 = por %p31, %p32
    %p35 = scmp.ne.s32.totalorder %s20, %s34
    %p36 = scmp.eq.s32.totalorder %s15, 0
    %p37 = por %p35, %p36
    %s39 = sadd.s32 %s38, 1
    %p42 = scmp.eq.s32.totalorder %s9, 3
    %p43 = scmp.ne.s32.totalorder %s38, %s40
    %p44 = scmp.eq.s32.totalorder %s9, 0
    %p45 = por %p43, %p44
    %p46 = scmp.ne.s32.totalorder %s38, %s40
    %p47 = scmp.eq.s32.totalorder %s14, 3
    %p48 = por %p46, %p47
    %p49 = scmp.ne.s32.totalorder %s40, %s41
    %p50 = scmp.eq.s32.totalorder %s14, 0
    %p51 = por %p49, %p50
    %p52 = scmp.ne.s32.totalorder %s40, %s41
    %p53 = scmp.eq.s32.totalorder %s15, 3
    %p54 = por %p52, %p53
    %p56 = scmp.ne.s32.totalorder %s41, %s55
    %p57 = scmp.eq.s32.totalorder %s15, 0
    %p58 = por %p56, %p57
    %s59 = ssub.s32 %s9, %s16
    %p60 = scmp.eq.s32.totalorder %s59, 0
    %s62 = sadd.s32 %s61, 1
    %s63 = scalar_select %p60, %s61, %s62
    %p66 = pneg %p60
    %p67 = scmp.eq.s32.totalorder %s9, 3
    %p68 = por %p66, %p67
    %p69 = scmp.ne.s32.totalorder %s61, %s64
    %p70 = scmp.eq.s32.totalorder %s9, 0
    %p71 = por %p69, %p70
    %p72 = scmp.ne.s32.totalorder %s61, %s64
    %p73 = scmp.eq.s32.totalorder %s14, 3
    %p74 = por %p72, %p73
    %p75 = scmp.ne.s32.totalorder %s64, %s65
    %p76 = scmp.eq.s32.totalorder %s14, 0
    %p77 = por %p75, %p76
    %p78 = scmp.ne.s32.totalorder %s64, %s65
    %p79 = scmp.eq.s32.totalorder %s15, 3
    %p80 = por %p78, %p79
    %p82 = scmp.ne.s32.totalorder %s65, %s81
    %p83 = scmp.eq.s32.totalorder %s15, 0
    %p84 = por %p82, %p83
    %s85 = ssub.s32 %s9, %s16
    %p86 = scmp.eq.s32.totalorder %s85, 0
    %s88 = sadd.s32 %s87, 1
    %s89 = scalar_select %p86, %s87, %s88
    %p92 = pneg %p86
    %p93 = scmp.eq.s32.totalorder %s9, 3
    %p94 = por %p92, %p93
    %p95 = scmp.ne.s32.totalorder %s87, %s90
    %p96 = scmp.eq.s32.totalorder %s9, 0
    %p97 = por %p95, %p96
    %p98 = scmp.ne.s32.totalorder %s87, %s90
    %p99 = scmp.eq.s32.totalorder %s14, 3
    %p100 = por %p98, %p99
    %p101 = scmp.ne.s32.totalorder %s90, %s91
    %p102 = scmp.eq.s32.totalorder %s14, 0
    %p103 = por %p101, %p102
    %p104 = scmp.ne.s32.totalorder %s90, %s91
    %p105 = scmp.eq.s32.totalorder %s15, 3
    %p106 = por %p104, %p105
    %p108 = scmp.ne.s32.totalorder %s91, %s107
    %p109 = scmp.eq.s32.totalorder %s15, 0
    %p110 = por %p108, %p109
    %p111 = scmp.le.s32.totalorder 1, %s9
    %p112 = scmp.lt.s32.totalorder %s9, 5
    %p113 = pnand %p111, %p112
    %p114 = pneg %p113
    // Predicated region
    $region9: #{tpu_custom_call.1} parent=5 // pred_check
      _
    $region10: #{tpu_custom_call.1} parent=5 // pred_check_branch
      %116 = sbr.rel (%p113) target = $region12
    $region11: #{tpu_custom_call.1} parent=5 // pred_region
      %s117 = ssub.s32 %s9, 1
      // Predicated region
      $region13: #{tpu_custom_call.1} parent=11 // pred_check
        %p118 = pneg %p30
      $region14: #{tpu_custom_call.1} parent=11 // pred_check_branch
        %120 = sbr.rel (%p118) target = $region16
      $region15: #{tpu_custom_call.1} parent=11 // pred_region
        _
      $region16: #{tpu_custom_call.1} parent=11 // pred_fallthru
        _
      // Predicated region
      $region17: #{tpu_custom_call.1} parent=11 // pred_check
        %p121 = pneg %p51
      $region18: #{tpu_custom_call.1} parent=11 // pred_check_branch
        %123 = sbr.rel (%p121) target = $region20
      $region19: #{tpu_custom_call.1} parent=11 // pred_region
        _
      $region20: #{tpu_custom_call.1} parent=11 // pred_fallthru
        _
    $region12: #{tpu_custom_call.1} parent=5 // pred_fallthru
      _
    %p124 = scmp.lt.s32.totalorder %s9, 4
    // Predicated region
    $region21: #{tpu_custom_call.1} parent=5 // pred_check
      %p125 = pneg %p124
    $region22: #{tpu_custom_call.1} parent=5 // pred_check_branch
      %127 = sbr.rel (%p125) target = $region24
    $region23: #{tpu_custom_call.1} parent=5 // pred_region
      // Predicated region
      $region25: #{tpu_custom_call.1} parent=23 // pred_check
        %p128 = pneg %p71
      $region26: #{tpu_custom_call.1} parent=23 // pred_check_branch
        %130 = sbr.rel (%p128) target = $region28
      $region27: #{tpu_custom_call.1} parent=23 // pred_region
        %s131 = smul.u32 4, %s9
        %p132 = scmp.lt.s32.totalorder %s131, 15
        %s133 = scalar_select %p132, %s131, 15
        %s134 = smul.addr %s133, 8
        %s135 = scalar_lea.vmem %s2, %s134
        %s136 = smul.u32 4, %s9
      $region28: #{tpu_custom_call.1} parent=23 // pred_fallthru
        _
    $region24: #{tpu_custom_call.1} parent=5 // pred_fallthru
      _
    %p137 = scmp.le.s32.totalorder 1, %s9
    %p138 = scmp.lt.s32.totalorder %s9, 5
    %p139 = pnand %p137, %p138
    %p140 = pneg %p139
    // Predicated region
    $region29: #{tpu_custom_call.1} parent=5 // pred_check
      _
    $region30: #{tpu_custom_call.1} parent=5 // pred_check_branch
      %142 = sbr.rel (%p139) target = $region32
    $region31: #{tpu_custom_call.1} parent=5 // pred_region
      %s143 = ssub.s32 %s9, 1
      %p144 = pneg %p30
      %p145 = pneg %p27
      %p146 = pneg %p51
      %p147 = pneg %p48
      %s148 = smul.u32 4, %s14
      %p149 = scmp.lt.s32.totalorder %s148, 15
      %s150 = scalar_select %p149, %s148, 15
      %s151 = smul.addr %s150, 8
      %s152 = scalar_lea.vmem %s2, %s151
      %p153 = pneg %p77
      %p154 = pneg %p74
      %p155 = pneg %p103
      %p156 = pneg %p100
      %s157 = smul.u32 8, %s14
      %p158 = scmp.lt.s32.totalorder %s157, 31
      %s159 = scalar_select %p158, %s157, 31
      %s160 = smul.addr %s159, 8
      %s161 = scalar_lea.vmem %s3, %s160
      %s162 = smul.u32 4, %s14
      %p163 = scmp.lt.s32.totalorder %s162, 15
      %s164 = scalar_select %p163, %s162, 15
      %s165 = smul.addr %s164, 8
      %s166 = scalar_lea.vmem %s2, %s165
      %s167 = smul.u32 4, %s14
      %s168 = smul.u32 8, %s14
      %p169 = scmp.lt.s32.totalorder %s168, 31
      %s170 = scalar_select %p169, %s168, 31
      %s171 = smul.addr %s170, 8
      %s172 = scalar_lea.vmem %s3, %s171
      %s173 = smul.u32 8, %s14
      %v174 = vld [vmem:[%s0] sm:$0xff]
      %v175 = vld [vmem:[%s0 + $0x8] sm:$0xff]
      %v176 = vld [vmem:[%s0 + $0x10] sm:$0xff]
      %v177 = vld [vmem:[%s0 + $0x18] sm:$0xff]
      %v178 = vld [vmem:[%s166] sm:$0xff]
      %v179 = vld [vmem:[%s166 + $0x8] sm:$0xff]
      %vm180 = vcmask 130048
      %v182 = vsel %vm180, %v174, 0
      %v185 = vsel %vm180, %v175, 0
      %v188 = vsel %vm180, %v176, 0
      %v191 = vsel %vm180, %v177, 0
      %193 = vmatprep.subr.mxu0 0.0
      %194 = vmatpush1.msra.mxu0 %v178
      %195 = vmatprep.subr.mxu0 0.0
      %196 = vmatpush1.msra.mxu0 %v179
      %197 = vmatprep.subr.mxu0 0.0
      %198 = vmatpush1.msra.mxu0 0.0
      %199 = vmatprep.subr.mxu0 0.0
      %200 = vmatpush1.msra.mxu0 0.0
      %201 = vmatprep.subr.mxu0 0.0
      %202 = vmatpush1.msra.mxu0 0.0
      %203 = vmatprep.subr.mxu0 0.0
      %204 = vmatpush1.msra.mxu0 0.0
      %205 = vmatprep.subr.mxu0 0.0
      %206 = vmatpush1.msra.mxu0 0.0
      %207 = vmatprep.subr.mxu0 0.0
      %208 = vmatpush1.msra.mxu0 0.0
      %209 = vmatprep.subr.mxu0 0.0
      %210 = vmatpush1.msra.mxu0 0.0
      %211 = vmatprep.subr.mxu0 0.0
      %212 = vmatpush1.msra.mxu0 0.0
      %213 = vmatprep.subr.mxu0 0.0
      %214 = vmatpush1.msra.mxu0 0.0
      %215 = vmatprep.subr.mxu0 0.0
      %216 = vmatpush1.msra.mxu0 0.0
      %217 = vmatprep.subr.mxu0 0.0
      %218 = vmatpush1.msra.mxu0 0.0
      %219 = vmatprep.subr.mxu0 0.0
      %220 = vmatpush1.msra.mxu0 0.0
      %221 = vmatprep.subr.mxu0 0.0
      %222 = vmatpush1.msra.mxu0 0.0
      %223 = vmatprep.subr.mxu0 0.0
      %224 = vmatpush1.msra.mxu0 0.0
      %225 = vmatprep.subr.mxu0 0.0
      %226 = vmatpush1.msra.mxu0 0.0
      %227 = vmatprep.subr.mxu0 0.0
      %228 = vmatpush1.msra.mxu0 0.0
      %229 = vmatprep.subr.mxu0 0.0
      %230 = vmatpush1.msra.mxu0 0.0
      %231 = vmatprep.subr.mxu0 0.0
      %232 = vmatpush1.msra.mxu0 0.0
      %233 = vmatprep.subr.mxu0 0.0
      %234 = vmatpush1.msra.mxu0 0.0
      %235 = vmatprep.subr.mxu0 0.0
      %236 = vmatpush1.msra.mxu0 0.0
      %237 = vmatprep.subr.mxu0 0.0
      %238 = vmatpush1.msra.mxu0 0.0
      %239 = vmatprep.subr.mxu0 0.0
      %240 = vmatpush1.msra.mxu0 0.0
      %241 = vmatprep.subr.mxu0 0.0
      %242 = vmatpush1.msra.mxu0 0.0
      %243 = vmatprep.subr.mxu0 0.0
      %244 = vmatpush1.msra.mxu0 0.0
      %245 = vmatprep.subr.mxu0 0.0
      %246 = vmatpush1.msra.mxu0 0.0
      %247 = vmatprep.subr.mxu0 0.0
      %248 = vmatpush1.msra.mxu0 0.0
      %249 = vmatprep.subr.mxu0 0.0
      %250 = vmatpush1.msra.mxu0 0.0
      %251 = vmatprep.subr.mxu0 0.0
      %252 = vmatpush1.msra.mxu0 0.0
      %253 = vmatprep.subr.mxu0 0.0
      %254 = vmatpush1.msra.mxu0 0.0
      %255 = vmatprep.subr.mxu0 0.0
      %256 = vmatpush1.msra.mxu0 0.0
      %257 = vmatprep.mubr.f32.mxu0 0.0
      %258 = vmatmul.mubr.f32.gmra.mrb[0].mxu0 %v182
      %v259 = vpop.f32.mrb[0].mxu0
      %v260 = vadd.f32 0.0, %v259
      %v261 = vpop.f32.mrb[0].mxu0
      %262 = vmatprep.mubr.f32.mxu0 0.0
      %263 = vmatmul.mubr.f32.gmra.mrb[0].mxu0 %v185
      %v264 = vpop.f32.mrb[0].mxu0
      %v265 = vadd.f32 0.0, %v264
      %v266 = vpop.f32.mrb[0].mxu0
      %267 = vmatprep.mubr.f32.mxu0 0.0
      %268 = vmatmul.mubr.f32.gmra.mrb[0].mxu0 %v188
      %v269 = vpop.f32.mrb[0].mxu0
      %v270 = vadd.f32 0.0, %v269
      %v271 = vpop.f32.mrb[0].mxu0
      %272 = vmatprep.mubr.f32.mxu0 0.0
      %273 = vmatmul.mubr.f32.gmra.mrb[0].mxu0 %v191
      %v274 = vpop.f32.mrb[0].mxu0
      %v275 = vadd.f32 0.0, %v274
      %v276 = vpop.f32.mrb[0].mxu0
      %277 = vdwg.mxu0
      %278 = vst.msk [vmem:[#allocation2] sm:$0xff] %vm180, %v260
      %279 = vst.msk [vmem:[#allocation2 + $0x8] sm:$0xff] %vm180, %v265
      %280 = vst.msk [vmem:[#allocation2 + $0x10] sm:$0xff] %vm180, %v270
      %281 = vst.msk [vmem:[#allocation2 + $0x18] sm:$0xff] %vm180, %v275
      %v282 = vld [vmem:[%s166 + $0x10] sm:$0xff]
      %v283 = vld [vmem:[%s166 + $0x18] sm:$0xff]
      %284 = vmatprep.subr.mxu0 0.0
      %285 = vmatpush1.msra.mxu0 %v282
      %286 = vmatprep.subr.mxu0 0.0
      %287 = vmatpush1.msra.mxu0 %v283
      %288 = vmatprep.subr.mxu0 0.0
      %289 = vmatpush1.msra.mxu0 0.0
      %290 = vmatprep.subr.mxu0 0.0
      %291 = vmatpush1.msra.mxu0 0.0
      %292 = vmatprep.subr.mxu0 0.0
      %293 = vmatpush1.msra.mxu0 0.0
      %294 = vmatprep.subr.mxu0 0.0
      %295 = vmatpush1.msra.mxu0 0.0
      %296 = vmatprep.subr.mxu0 0.0
      %297 = vmatpush1.msra.mxu0 0.0
      %298 = vmatprep.subr.mxu0 0.0
      %299 = vmatpush1.msra.mxu0 0.0
      %300 = vmatprep.subr.mxu0 0.0
      %301 = vmatpush1.msra.mxu0 0.0
      %302 = vmatprep.subr.mxu0 0.0
      %303 = vmatpush1.msra.mxu0 0.0
      %304 = vmatprep.subr.mxu0 0.0
      %305 = vmatpush1.msra.mxu0 0.0
      %306 = vmatprep.subr.mxu0 0.0
      %307 = vmatpush1.msra.mxu0 0.0
      %308 = vmatprep.subr.mxu0 0.0
      %309 = vmatpush1.msra.mxu0 0.0
      %310 = vmatprep.subr.mxu0 0.0
      %311 = vmatpush1.msra.mxu0 0.0
      %312 = vmatprep.subr.mxu0 0.0
      %313 = vmatpush1.msra.mxu0 0.0
      %314 = vmatprep.subr.mxu0 0.0
      %315 = vmatpush1.msra.mxu0 0.0
      %316 = vmatprep.subr.mxu0 0.0
      %317 = vmatpush1.msra.mxu0 0.0
      %318 = vmatprep.subr.mxu0 0.0
      %319 = vmatpush1.msra.mxu0 0.0
      %320 = vmatprep.subr.mxu0 0.0
      %321 = vmatpush1.msra.mxu0 0.0
      %322 = vmatprep.subr.mxu0 0.0
      %323 = vmatpush1.msra.mxu0 0.0
      %324 = vmatprep.subr.mxu0 0.0
      %325 = vmatpush1.msra.mxu0 0.0
      %326 = vmatprep.subr.mxu0 0.0
      %327 = vmatpush1.msra.mxu0 0.0
      %328 = vmatprep.subr.mxu0 0.0
      %329 = vmatpush1.msra.mxu0 0.0
      %330 = vmatprep.subr.mxu0 0.0
      %331 = vmatpush1.msra.mxu0 0.0
      %332 = vmatprep.subr.mxu0 0.0
      %333 = vmatpush1.msra.mxu0 0.0
      %334 = vmatprep.subr.mxu0 0.0
      %335 = vmatpush1.msra.mxu0 0.0
      %336 = vmatprep.subr.mxu0 0.0
      %337 = vmatpush1.msra.mxu0 0.0
      %338 = vmatprep.subr.mxu0 0.0
      %339 = vmatpush1.msra.mxu0 0.0
      %340 = vmatprep.subr.mxu0 0.0
      %341 = vmatpush1.msra.mxu0 0.0
      %342 = vmatprep.subr.mxu0 0.0
      %343 = vmatpush1.msra.mxu0 0.0
      %344 = vmatprep.subr.mxu0 0.0
      %345 = vmatpush1.msra.mxu0 0.0
      %346 = vmatprep.subr.mxu0 0.0
      %347 = vmatpush1.msra.mxu0 0.0
      %348 = vmatprep.mubr.f32.mxu0 0.0
      %349 = vmatmul.mubr.f32.gmra.mrb[0].mxu0 %v182
      %v350 = vpop.f32.mrb[0].mxu0
      %v351 = vadd.f32 0.0, %v350
      %v352 = vpop.f32.mrb[0].mxu0
      %353 = vmatprep.mubr.f32.mxu0 0.0
      %354 = vmatmul.mubr.f32.gmra.mrb[0].mxu0 %v185
      %v355 = vpop.f32.mrb[0].mxu0
      %v356 = vadd.f32 0.0, %v355
      %v357 = vpop.f32.mrb[0].mxu0
      %358 = vmatprep.mubr.f32.mxu0 0.0
      %359 = vmatmul.mubr.f32.gmra.mrb[0].mxu0 %v188
      %v360 = vpop.f32.mrb[0].mxu0
      %v361 = vadd.f32 0.0, %v360
      %v362 = vpop.f32.mrb[0].mxu0
      %363 = vmatprep.mubr.f32.mxu0 0.0
      %364 = vmatmul.mubr.f32.gmra.mrb[0].mxu0 %v191
      %v365 = vpop.f32.mrb[0].mxu0
      %v366 = vadd.f32 0.0, %v365
      %v367 = vpop.f32.mrb[0].mxu0
      %368 = vdwg.mxu0
      %369 = vst.msk [vmem:[#allocation2 + $0x20] sm:$0xff] %vm180, %v351
      %370 = vst.msk [vmem:[#allocation2 + $0x28] sm:$0xff] %vm180, %v356
      %371 = vst.msk [vmem:[#allocation2 + $0x30] sm:$0xff] %vm180, %v361
      %372 = vst.msk [vmem:[#allocation2 + $0x38] sm:$0xff] %vm180, %v366
      %v373 = vld [vmem:[#allocation2] sm:$0xff]
      %v374 = vld [vmem:[#allocation2 + $0x8] sm:$0xff]
      %v375 = vld [vmem:[#allocation2 + $0x10] sm:$0xff]
      %v376 = vld [vmem:[#allocation2 + $0x18] sm:$0xff]
      %v377 = vld [vmem:[#allocation2 + $0x20] sm:$0xff]
      %v378 = vld [vmem:[#allocation2 + $0x28] sm:$0xff]
      %v379 = vld [vmem:[#allocation2 + $0x30] sm:$0xff]
      %v380 = vld [vmem:[#allocation2 + $0x38] sm:$0xff]
      %v381 = vld [vmem:[%s1] sm:$0xff]
      %v382 = vld [vmem:[%s1 + $0x8] sm:$0xff]
      %v384 = vsel %vm180, %v373, 0
      %v387 = vsel %vm180, %v374, 0
      %v390 = vsel %vm180, %v375, 0
      %v393 = vsel %vm180, %v376, 0
      %v396 = vsel %vm180, %v377, 0
      %v399 = vsel %vm180, %v378, 0
      %v402 = vsel %vm180, %v379, 0
      %v405 = vsel %vm180, %v380, 0
      %407 = vmatprep.subr.mxu0 0.0
      %408 = vmatpush1.msra.mxu0 %v381
      %409 = vmatprep.subr.mxu0 0.0
      %410 = vmatpush1.msra.mxu0 %v382
      %411 = vmatprep.subr.mxu0 0.0
      %412 = vmatpush1.msra.mxu0 0.0
      %413 = vmatprep.subr.mxu0 0.0
      %414 = vmatpush1.msra.mxu0 0.0
      %415 = vmatprep.subr.mxu0 0.0
      %416 = vmatpush1.msra.mxu0 0.0
      %417 = vmatprep.subr.mxu0 0.0
      %418 = vmatpush1.msra.mxu0 0.0
      %419 = vmatprep.subr.mxu0 0.0
      %420 = vmatpush1.msra.mxu0 0.0
      %421 = vmatprep.subr.mxu0 0.0
      %422 = vmatpush1.msra.mxu0 0.0
      %423 = vmatprep.subr.mxu0 0.0
      %424 = vmatpush1.msra.mxu0 0.0
      %425 = vmatprep.subr.mxu0 0.0
      %426 = vmatpush1.msra.mxu0 0.0
      %427 = vmatprep.subr.mxu0 0.0
      %428 = vmatpush1.msra.mxu0 0.0
      %429 = vmatprep.subr.mxu0 0.0
      %430 = vmatpush1.msra.mxu0 0.0
      %431 = vmatprep.subr.mxu0 0.0
      %432 = vmatpush1.msra.mxu0 0.0
      %433 = vmatprep.subr.mxu0 0.0
      %434 = vmatpush1.msra.mxu0 0.0
      %435 = vmatprep.subr.mxu0 0.0
      %436 = vmatpush1.msra.mxu0 0.0
      %437 = vmatprep.subr.mxu0 0.0
      %438 = vmatpush1.msra.mxu0 0.0
      %439 = vmatprep.subr.mxu0 0.0
      %440 = vmatpush1.msra.mxu0 0.0
      %441 = vmatprep.subr.mxu0 0.0
      %442 = vmatpush1.msra.mxu0 0.0
      %443 = vmatprep.subr.mxu0 0.0
      %444 = vmatpush1.msra.mxu0 0.0
      %445 = vmatprep.subr.mxu0 0.0
      %446 = vmatpush1.msra.mxu0 0.0
      %447 = vmatprep.subr.mxu0 0.0
      %448 = vmatpush1.msra.mxu0 0.0
      %449 = vmatprep.subr.mxu0 0.0
      %450 = vmatpush1.msra.mxu0 0.0
      %451 = vmatprep.subr.mxu0 0.0
      %452 = vmatpush1.msra.mxu0 0.0
      %453 = vmatprep.subr.mxu0 0.0
      %454 = vmatpush1.msra.mxu0 0.0
      %455 = vmatprep.subr.mxu0 0.0
      %456 = vmatpush1.msra.mxu0 0.0
      %457 = vmatprep.subr.mxu0 0.0
      %458 = vmatpush1.msra.mxu0 0.0
      %459 = vmatprep.subr.mxu0 0.0
      %460 = vmatpush1.msra.mxu0 0.0
      %461 = vmatprep.subr.mxu0 0.0
      %462 = vmatpush1.msra.mxu0 0.0
      %463 = vmatprep.subr.mxu0 0.0
      %464 = vmatpush1.msra.mxu0 0.0
      %465 = vmatprep.subr.mxu0 0.0
      %466 = vmatpush1.msra.mxu0 0.0
      %467 = vmatprep.subr.mxu0 0.0
      %468 = vmatpush1.msra.mxu0 0.0
      %469 = vmatprep.subr.mxu0 0.0
      %470 = vmatpush1.msra.mxu0 0.0
      %471 = vmatprep.mubr.f32.mxu0 0.0
      %472 = vmatmul.mubr.f32.gmra.mrb[0].mxu0 %v384
      %v473 = vpop.f32.mrb[0].mxu0
      %v474 = vadd.f32 0.0, %v473
      %v475 = vpop.f32.mrb[0].mxu0
      %476 = vmatprep.mubr.f32.mxu0 0.0
      %477 = vmatmul.mubr.f32.gmra.mrb[0].mxu0 %v387
      %v478 = vpop.f32.mrb[0].mxu0
      %v479 = vadd.f32 0.0, %v478
      %v480 = vpop.f32.mrb[0].mxu0
      %481 = vmatprep.mubr.f32.mxu0 0.0
      %482 = vmatmul.mubr.f32.gmra.mrb[0].mxu0 %v390
      %v483 = vpop.f32.mrb[0].mxu0
      %v484 = vadd.f32 0.0, %v483
      %v485 = vpop.f32.mrb[0].mxu0
      %486 = vmatprep.mubr.f32.mxu0 0.0
      %487 = vmatmul.mubr.f32.gmra.mrb[0].mxu0 %v393
      %v488 = vpop.f32.mrb[0].mxu0
      %v489 = vadd.f32 0.0, %v488
      %v490 = vpop.f32.mrb[0].mxu0
      %491 = vmatprep.mubr.f32.mxu0 0.0
      %492 = vmatmul.mubr.f32.gmra.mrb[0].mxu0 %v396
      %v493 = vpop.f32.mrb[0].mxu0
      %v494 = vadd.f32 0.0, %v493
      %v495 = vpop.f32.mrb[0].mxu0
      %496 = vmatprep.mubr.f32.mxu0 0.0
      %497 = vmatmul.mubr.f32.gmra.mrb[0].mxu0 %v399
      %v498 = vpop.f32.mrb[0].mxu0
      %v499 = vadd.f32 0.0, %v498
      %v500 = vpop.f32.mrb[0].mxu0
      %501 = vmatprep.mubr.f32.mxu0 0.0
      %502 = vmatmul.mubr.f32.gmra.mrb[0].mxu0 %v402
      %v503 = vpop.f32.mrb[0].mxu0
      %v504 = vadd.f32 0.0, %v503
      %v505 = vpop.f32.mrb[0].mxu0
      %506 = vmatprep.mubr.f32.mxu0 0.0
      %507 = vmatmul.mubr.f32.gmra.mrb[0].mxu0 %v405
      %v508 = vpop.f32.mrb[0].mxu0
      %v509 = vadd.f32 0.0, %v508
      %v510 = vpop.f32.mrb[0].mxu0
      %511 = vdwg.mxu0
      %vm512 = vcmask 261120
      %513 = vst.msk [vmem:[%s172] sm:$0xff] %vm512, %v474
      %514 = vst.msk [vmem:[%s172 + $0x8] sm:$0xff] %vm512, %v479
      %515 = vst.msk [vmem:[%s172 + $0x10] sm:$0xff] %vm512, %v484
      %516 = vst.msk [vmem:[%s172 + $0x18] sm:$0xff] %vm512, %v489
      %517 = vst.msk [vmem:[%s172 + $0x20] sm:$0xff] %vm512, %v494
      %518 = vst.msk [vmem:[%s172 + $0x28] sm:$0xff] %vm512, %v499
      %519 = vst.msk [vmem:[%s172 + $0x30] sm:$0xff] %vm512, %v504
      %520 = vst.msk [vmem:[%s172 + $0x38] sm:$0xff] %vm512, %v509
      %s521 = smul.u32 8, %s14
      %p522 = scmp.lt.s32.totalorder %s521, 31
      %s523 = scalar_select %p522, %s521, 31
      %s524 = smul.addr %s523, 8
      %s525 = scalar_lea.vmem %s3, %s524
      // Predicated region
      $region33: #{tpu_custom_call.1} parent=31 // pred_check
        %p526 = pneg %p100
      $region34: #{tpu_custom_call.1} parent=31 // pred_check_branch
        %528 = sbr.rel (%p526) target = $region36
      $region35: #{tpu_custom_call.1} parent=31 // pred_region
        %s529 = smul.u32 8, %s14
      $region36: #{tpu_custom_call.1} parent=31 // pred_fallthru
        _
    $region32: #{tpu_custom_call.1} parent=5 // pred_fallthru
      _
    %p530 = scmp.le.s32.totalorder 2, %s9
    // Predicated region
    $region37: #{tpu_custom_call.1} parent=5 // pred_check
      %p531 = pneg %p530
    $region38: #{tpu_custom_call.1} parent=5 // pred_check_branch
      %533 = sbr.rel (%p531) target = $region40
    $region39: #{tpu_custom_call.1} parent=5 // pred_region
      %s534 = ssub.s32 %s9, 2
      // Predicated region
      $region41: #{tpu_custom_call.1} parent=39 // pred_check
        %p535 = pneg %p106
      $region42: #{tpu_custom_call.1} parent=39 // pred_check_branch
        %537 = sbr.rel (%p535) target = $region44
      $region43: #{tpu_custom_call.1} parent=39 // pred_region
        %s538 = smul.u32 8, %s15
        %p539 = scmp.lt.s32.totalorder %s538, 31
        %s540 = scalar_select %p539, %s538, 31
        %s541 = smul.addr %s540, 8
        %s542 = scalar_lea.vmem %s3, %s541
      $region44: #{tpu_custom_call.1} parent=39 // pred_fallthru
        _
    $region40: #{tpu_custom_call.1} parent=5 // pred_fallthru
      _
  $region6: #{tpu_custom_call.1} parent=0 // loop_footer
    %s13 = sadd.s32 1, %s9
  $region7: #{tpu_custom_call.1} parent=0 // loop_footer_branch
    %8 = sbr.rel target = $region3
  $region8: #{tpu_custom_call.1} parent=0 // loop_exit
    _

</llo_original>
